<compile_context>
chip_gen: v6e
topology: v6e:2x2x1
jax: 0.10.0
libtpu: 0.0.40
codegen_flags: <defaults>
</compile_context>

<pallas_src>
import functools

import jax
import jax.numpy as jnp
from jax.experimental import pallas as pl
from jax.experimental.pallas import tpu as pltpu

_MIB = 1024 * 1024


def _scale_kernel(scale_ref, x_ref, o_ref, *, compute_dtype):
    # scale lives in SMEM (scalar prefetch) as float32; cast it once to the
    # compute dtype.  When in/out/compute dtypes all match, every cast below
    # is a no-op and this is a single VPU multiply per vreg.
    s = scale_ref[0].astype(compute_dtype)
    o_ref[...] = (x_ref[...].astype(compute_dtype) * s).astype(o_ref.dtype)


def _round_up(v, m):
    return ((v + m - 1) // m) * m


def _round_down(v, m):
    return (v // m) * m


def _tpu_vmem_capacity_bytes():
    try:
        return int(pltpu.get_tpu_info().vmem_capacity_bytes)
    except Exception:
        return 64 * _MIB  # most restrictive (v7x); safe everywhere


def _has_low_precision_valu():
    # v6e / v7x have a bf16-capable VALU; v5e and older do not.
    try:
        kind = jax.devices()[0].device_kind.lower()
    except Exception:
        return False
    return not any(t in kind for t in ("v2", "v3", "v4", "v5"))


def multiply_by(x, scale_value=5.0):
    """Elementwise x * scale_value (torch.mul(input, python_float)) via Pallas."""
    orig_shape = x.shape

    # torch.mul(tensor, python_float): floating tensors keep their dtype,
    # integer/bool tensors promote to the default float dtype (float32).
    # The int->float cast happens *inside* the kernel (no extra HBM pass).
    if jnp.issubdtype(x.dtype, jnp.floating):
        out_dtype = x.dtype
    else:
        out_dtype = jnp.float32

    # Compute dtype: native for f32, native for bf16/f16 on bf16-VALU chips
    # (v6e/v7x), otherwise f32 (v5e low-precision, integer inputs).
    if out_dtype == jnp.float32:
        compute_dtype = jnp.float32
    elif jnp.issubdtype(x.dtype, jnp.floating) and _has_low_precision_valu():
        compute_dtype = out_dtype
    else:
        compute_dtype = jnp.float32

    n = x.size
    in_itemsize = jnp.dtype(x.dtype).itemsize
    out_itemsize = jnp.dtype(out_dtype).itemsize

    # Generation-aware block budget (resident = 2x in + 2x out blocks).
    vmem_cap = _tpu_vmem_capacity_bytes()
    if vmem_cap >= 128 * _MIB:            # v5e / v6e (128 MiB VMEM)
        target_block_bytes = 8 * _MIB     # ~32 MiB resident
        vmem_limit_bytes = 64 * _MIB
    else:                                 # v7x (64 MiB VMEM)
        target_block_bytes = 4 * _MIB     # ~16 MiB resident
        vmem_limit_bytes = 48 * _MIB

    scale = jnp.asarray([scale_value], dtype=jnp.float32)
    kernel = functools.partial(_scale_kernel, compute_dtype=compute_dtype)
    compiler_params = pltpu.CompilerParams(
        dimension_semantics=("parallel",),   # shards blocks across v7x TCs
        vmem_limit_bytes=vmem_limit_bytes,
    )

    x_flat = jnp.ravel(x)  # zero-copy view of a contiguous input
    lane = 128

    if n % lane == 0:
        # ---- Main path: zero-copy reshape to a lane-dense 2-D slab ----
        rows = n // lane

        # Sublane-packing alignment: 8 rows for 32-bit, 16 for bf16/f16,
        # 32 for int8/fp8 (cover both the input and the output dtype).
        row_align = max(8 * max(1, 4 // in_itemsize),
                        8 * max(1, 4 // out_itemsize))

        per_row_bytes = lane * max(in_itemsize, out_itemsize)
        tile_rows = max(row_align,
                        _round_down(target_block_bytes // per_row_bytes, row_align))

        total_bytes = n * (in_itemsize + out_itemsize)
        if tile_rows >= rows:
            if total_bytes >= 2 * _MIB and rows >= 2 * row_align:
                # Keep >=2 blocks so both v7x TensorCores stream (one extra
                # ~0.35us grid step is noise at these sizes).
                tile_rows = min(_round_up(pl.cdiv(rows, 2), row_align), rows)
            else:
                tile_rows = rows          # tiny input: single full-dim block
        grid = (pl.cdiv(rows, tile_rows),)

        x2d = x_flat.reshape(rows, lane)
        out2d = pl.pallas_call(
            kernel,
            out_shape=jax.ShapeDtypeStruct((rows, lane), out_dtype),
            grid_spec=pltpu.PrefetchScalarGridSpec(
                num_scalar_prefetch=1,    # scale -> SMEM, no recompiles
                grid=grid,
                in_specs=[pl.BlockSpec((tile_rows, lane), lambda i, s: (i, 0))],
                out_specs=pl.BlockSpec((tile_rows, lane), lambda i, s: (i, 0)),
            ),
            compiler_params=compiler_params,
        )(scale, x2d)
        return out2d.reshape(orig_shape)

    # ---- Ragged path (n % 128 != 0): 1-D blocks, masked partial last block.
    # No jnp.pad / trailing slice -> no extra HBM passes.  Blocks are kept
    # modest because 1-D VMEM layouts are sublane-sparse.
    blk = min(n, 64 * 1024)
    if blk < n:
        blk = _round_down(blk, lane)      # 128-divisible block, masked tail
        grid = (pl.cdiv(n, blk),)
    else:
        blk = n                           # full-dim single block (always legal)
        grid = (1,)

    out_flat = pl.pallas_call(
        kernel,
        out_shape=jax.ShapeDtypeStruct((n,), out_dtype),
        grid_spec=pltpu.PrefetchScalarGridSpec(
            num_scalar_prefetch=1,
            grid=grid,
            in_specs=[pl.BlockSpec((blk,), lambda i, s: (i,))],
            out_specs=pl.BlockSpec((blk,), lambda i, s: (i,)),
        ),
        compiler_params=compiler_params,
    )(scale, x_flat)
    return out_flat.reshape(orig_shape)


if __name__ == "__main__":
    key = jax.random.PRNGKey(0)
    # NCHW like the PyTorch module would receive (batch=2, channels=4, 16x16).
    x = jax.random.normal(key, (2, 4, 16, 16), dtype=jnp.float32)

    y = multiply_by(x, scale_value=5.0)
    y = jax.block_until_ready(y)

    y_ref = x * 5.0
    assert y.shape == x.shape and y.dtype == x.dtype
    assert jnp.allclose(y, y_ref, atol=1e-6, rtol=1e-6)
    print("KERNEL_OK")
</pallas_src>

<mosaic_0001>
module attributes {stable_mosaic.version = 11 : i64} {
  func.func @_scale_kernel(%arg0: i32, %arg1: memref<1xf32, #tpu.memory_space<smem>>, %arg2: memref<16x128xf32, #tpu.memory_space<vmem>>, %arg3: memref<16x128xf32, #tpu.memory_space<vmem>>) attributes {dimension_semantics = [#tpu.dimension_semantics<parallel>], iteration_bounds = array<i64: 1>, scalar_prefetch = 1 : i64, scratch_operands = 0 : i64, tpu.core_type = #tpu.core_type<tc>, window_params = [{transform_indices = @transform_0, window_bounds = array<i64: 16, 128>}, {transform_indices = @transform_1, window_bounds = array<i64: 16, 128>}]} {
    %c0 = arith.constant 0 : index
    %0 = memref.load %arg1[%c0] : memref<1xf32, #tpu.memory_space<smem>>
    %c0_0 = arith.constant 0 : index
    %c0_1 = arith.constant 0 : index
    %1 = vector.load %arg2[%c0_0, %c0_1] : memref<16x128xf32, #tpu.memory_space<vmem>>, vector<16x128xf32>
    %2 = vector.broadcast %0 : f32 to vector<16x128xf32>
    %3 = arith.mulf %1, %2 : vector<16x128xf32>
    %c0_2 = arith.constant 0 : index
    %c0_3 = arith.constant 0 : index
    %4 = vector.load %arg3[%c0_2, %c0_3] : memref<16x128xf32, #tpu.memory_space<vmem>>, vector<16x128xf32>
    tpu.vector_store %arg3[%c0_2, %c0_3], %3 {strides = array<i32>} : memref<16x128xf32, #tpu.memory_space<vmem>>, vector<16x128xf32>,
    return
  }
  func.func @transform_0(%arg0: i32, %arg1: memref<1xf32, #tpu.memory_space<smem>>) -> (i32, i32) {
    %c0_i32 = arith.constant 0 : i32
    %c0_i32_0 = arith.constant 0 : i32
    return %arg0, %c0_i32 : i32, i32
  }
  func.func @transform_1(%arg0: i32, %arg1: memref<1xf32, #tpu.memory_space<smem>>) -> (i32, i32) {
    %c0_i32 = arith.constant 0 : i32
    %c0_i32_0 = arith.constant 0 : i32
    return %arg0, %c0_i32 : i32, i32
  }
}

</mosaic_0001>

<llo_original>
// kernel: tpu_custom_call.1
$region0: #{tpu_custom_call.1}
  #allocation0 [shape = 'u32[]', space=smem, size = 0x4, offset = 0x4, fixed_abs, tag = 'smem constant byte address 0x4 - core index']
  #allocation1 [shape = 'u32[144,128]{1,0:T(1,128)}', space=vmem, size = 0x12000, scoped, tag = 'internal scratch']
  #allocation2 [shape = 's32[1]{0}', space=sflag, size = 0x4, scoped, tag = 'scoped memory for tpu_custom_call.1']
  #allocation3 [shape = 'f32[1]{0:T(128)S(6)}', space=smem, size = 0x200, scoped, tag = 'prefetched SMEM operand 0']
  %s0 = inlined_call_operand.<no memory space> [shape: f32[1], index: 0, kind: input, shape index: {}]
  %s1 = inlined_call_operand.hbm [shape: f32[16,128], index: 1, kind: input, shape index: {}]
  %s2 = inlined_call_operand.hbm [shape: f32[16,128], index: 2, kind: output, shape index: {}]
  %s3 = sld [smem:[#allocation0]]
  $region18: #{tpu_custom_call.1} parent=0
    _
  %s5 = ssub.s32 1, %s3
  %s6 = scalar_select 0, %s5, %s3
  %7 = sst [smem:[#allocation3]] %s0
  $region1: #{tpu_custom_call.1} parent=0
    #allocation4 [shape = 'u8[8192]{0}', space=vmem, size = 0x2000, scoped, tag = 'input window, operand 1, single buffered']
    #allocation5 [shape = 's32[1]{0}', space=sflag, size = 0x4, scoped, tag = 'scoped memory for tpu_custom_call.1']
    #allocation6 [shape = 's32[1]{0}', space=sflag, size = 0x4, scoped, tag = 'scoped memory for tpu_custom_call.1']
    #allocation7 [shape = 'u8[8192]{0}', space=vmem, size = 0x2000, scoped, tag = 'output window, operand 0, single buffered']
    %8 = vsyncpa [#allocation5], 0
    %9 = vsyncpa [#allocation6], 0
    // Predicated region
    $region2: #{tpu_custom_call.1} parent=1 // pred_check
      _
    $region3: #{tpu_custom_call.1} parent=1 // pred_check_branch
      %11 = sbr.rel (0) target = $region5
    $region4: #{tpu_custom_call.1} parent=1 // pred_region
      %s13 = ssub.s32 256, 256
      %14 = vsyncadd [#allocation5], %s13
      %s15 = sshll.u32 [#allocation4], 4
      %s16 = int_to_ptr.vmem [resolvable:$true] %s15
      %21 = dma.hbm_to_vmem [thread:$0]  %s1, 256, %s16, [#allocation5], 128, 128, 8
    $region5: #{tpu_custom_call.1} parent=1 // pred_fallthru
      _
    // Predicated region
    $region6: #{tpu_custom_call.1} parent=1 // pred_check
      _
    $region7: #{tpu_custom_call.1} parent=1 // pred_check_branch
      %23 = sbr.rel (0) target = $region9
    $region8: #{tpu_custom_call.1} parent=1 // pred_region
      %24 = dma.done [#allocation5], 256
    $region9: #{tpu_custom_call.1} parent=1 // pred_fallthru
      _
    %s25 = sld [smem:[#allocation3]]
    %v26 = vld [vmem:[#allocation4] sm:$0xff]
    %v27 = vld [vmem:[#allocation4 + $0x8] sm:$0xff]
    %v28 = vstv %s25
    %v29 = vmul.f32 %v26, %v28
    %v30 = vmul.f32 %v27, %v28
    %31 = vst [vmem:[#allocation7] sm:$0xff] %v29
    %32 = vst [vmem:[#allocation7 + $0x8] sm:$0xff] %v30
    // Predicated region
    $region10: #{tpu_custom_call.1} parent=1 // pred_check
      _
    $region11: #{tpu_custom_call.1} parent=1 // pred_check_branch
      %34 = sbr.rel (0) target = $region13
    $region12: #{tpu_custom_call.1} parent=1 // pred_region
      %s36 = ssub.s32 256, 256
      %37 = vsyncadd [#allocation6], %s36
      %s38 = sshll.u32 [#allocation7], 4
      %s39 = int_to_ptr.vmem [resolvable:$true] %s38
      %44 = dma.vmem_to_hbm [thread:$0]  %s39, 256, %s2, [#allocation6], 128, 128, 8
    $region13: #{tpu_custom_call.1} parent=1 // pred_fallthru
      _
    // Predicated region
    $region14: #{tpu_custom_call.1} parent=1 // pred_check
      _
    $region15: #{tpu_custom_call.1} parent=1 // pred_check_branch
      %46 = sbr.rel (0) target = $region17
    $region16: #{tpu_custom_call.1} parent=1 // pred_region
      %47 = dma.done [#allocation6], 256
    $region17: #{tpu_custom_call.1} parent=1 // pred_fallthru
      _
    %48 = vsyncpa [#allocation5], 1
    %49 = vsyncpa [#allocation6], 1

</llo_original>
